<compile_context>
chip_gen: v5e
topology: v5e:2x2
jax: 0.10.0
libtpu: 0.0.40
codegen_flags: <defaults>
</compile_context>

<pallas_src>
import functools

import jax
import jax.numpy as jnp
from jax.experimental import pallas as pl
from jax.experimental.pallas import tpu as pltpu


BN_EPS = 1e-5

# Row indices inside the packed "small params" slab (shape (8, H), f32, zero padded).
_G1, _BE1, _G2, _BE2, _B3 = range(5)


def _fusion_kernel(x_ref, w1_ref, w2_ref, w3_ref, sm_ref, o_ref, st1_ref, st2_ref,
                   *, b_real, b_padded):
    """Grid = (3 phases, n_batch_tiles).

    x_ref:  (TB, 4E)  bf16  [a1|s1|a2|s2] batch tile (re-read each phase; recompute > HBM h1/h2)
    w1_ref: (4E, H)   bf16  fc1 weight            (resident: constant index_map)
    w2_ref: (H, H2)   bf16  fc2 weight            (resident)
    w3_ref: (8, H2)   bf16  out-head weight row 0 (resident)
    sm_ref: (8, H)    f32   [g1; be1; g2|0; be2|0; b3|0; 0; 0; 0] (resident)
    o_ref:  (1, TB)   f32   lane-dense logits (written only in phase 2)
    st1_ref:(3, H)    f32   bn1 [shift; sum(h-shift); sum((h-shift)^2)]
    st2_ref:(3, H2)   f32   bn2 stats, same layout

    fc1/fc2 biases are intentionally absent: a bias added right before a batch-stats
    BatchNorm is canceled exactly by the mean subtraction.
    """
    phase = pl.program_id(0)
    tile = pl.program_id(1)
    tb = x_ref.shape[0]
    h2d = w2_ref.shape[1]
    inv_b = 1.0 / b_real

    # ---- fc1: single lane-dense K matmul, bf16 operands, f32 accumulate (all phases) ----
    h1 = jnp.dot(x_ref[...], w1_ref[...], preferred_element_type=jnp.float32)

    def masked(v):
        # Zero out padded batch rows before they enter the BN statistics.
        if b_real == b_padded:                       # trace-time decision
            return v
        row = jax.lax.broadcasted_iota(jnp.int32, v.shape, 0) + tile * tb
        return jnp.where(row < b_real, v, 0.0)

    def mu_var(st_ref):
        # Shifted-moment batch stats: mu = shift + mean(d), var = E[d^2] - mean(d)^2.
        m = st_ref[1:2, :] * inv_b
        mu = st_ref[0:1, :] + m
        var = jnp.maximum(st_ref[2:3, :] * inv_b - m * m, 0.0)
        return mu, var

    # ---- phase 0: accumulate bn1 batch statistics -----------------------------------
    @pl.when(phase == 0)
    def _():
        @pl.when(tile == 0)
        def _():
            st1_ref[0:1, :] = h1[0:1, :]                     # per-feature shift
            st1_ref[1:3, :] = jnp.zeros((2, st1_ref.shape[1]), jnp.float32)
        d = masked(h1 - st1_ref[0:1, :])
        st1_ref[1:2, :] += jnp.sum(d, axis=0, keepdims=True)
        st1_ref[2:3, :] += jnp.sum(d * d, axis=0, keepdims=True)

    # ---- phases 1 & 2: bn1 + relu + fc2 (cheap recompute in phase 2) ------------------
    @pl.when(phase > 0)
    def _():
        g1 = sm_ref[_G1:_G1 + 1, :]
        be1 = sm_ref[_BE1:_BE1 + 1, :]
        mu1, var1 = mu_var(st1_ref)
        h1n = jnp.maximum((h1 - mu1) * jax.lax.rsqrt(var1 + BN_EPS) * g1 + be1, 0.0)
        h2 = jnp.dot(h1n.astype(jnp.bfloat16), w2_ref[...],
                     preferred_element_type=jnp.float32)

        # ---- phase 1: accumulate bn2 batch statistics ----
        @pl.when(phase == 1)
        def _():
            @pl.when(tile == 0)
            def _():
                st2_ref[0:1, :] = h2[0:1, :]
                st2_ref[1:3, :] = jnp.zeros((2, st2_ref.shape[1]), jnp.float32)
            d = masked(h2 - st2_ref[0:1, :])
            st2_ref[1:2, :] += jnp.sum(d, axis=0, keepdims=True)
            st2_ref[2:3, :] += jnp.sum(d * d, axis=0, keepdims=True)

        # ---- phase 2: bn2 + relu + out head, lane-dense (1, TB) logits ----
        @pl.when(phase == 2)
        def _():
            g2 = sm_ref[_G2:_G2 + 1, :h2d]
            be2 = sm_ref[_BE2:_BE2 + 1, :h2d]
            mu2, var2 = mu_var(st2_ref)
            h2n = jnp.maximum((h2 - mu2) * jax.lax.rsqrt(var2 + BN_EPS) * g2 + be2, 0.0)
            # Head as w3_row @ h2n^T (QK^T-style contraction) -> lane-dense (1, TB) output.
            head = jax.lax.dot_general(
                w3_ref[...], h2n.astype(jnp.bfloat16),
                dimension_numbers=(((1,), (1,)), ((), ())),
                preferred_element_type=jnp.float32)          # (8, TB); row 0 is the head
            o_ref[...] = head[0:1, :] + sm_ref[_B3:_B3 + 1, 0:1]


def pack_params(p):
    """One-time host-side prep: bf16 weights for the MXU, tiny params packed into slabs."""
    H = p["w1"].shape[1]
    H2 = p["w2"].shape[1]

    def row(v, width):
        v = jnp.asarray(v, jnp.float32).reshape(1, -1)
        return jnp.pad(v, ((0, 0), (0, width - v.shape[1])))

    sm = jnp.concatenate([
        row(p["g1"], H), row(p["be1"], H),        # bn1 gamma / beta
        row(p["g2"], H), row(p["be2"], H),        # bn2 gamma / beta (lane-padded)
        row(p["b3"], H),                          # out-head bias
        jnp.zeros((3, H), jnp.float32),           # pad to 8 sublanes
    ], axis=0)                                    # (8, H) f32

    w3m = jnp.zeros((8, H2), jnp.float32).at[0, :].set(p["w3"][:, 0]).astype(jnp.bfloat16)

    return {
        "w1": p["w1"].astype(jnp.bfloat16),       # (4E, H): single lane-dense contraction
        "w2": p["w2"].astype(jnp.bfloat16),       # (H, H2)
        "w3m": w3m,                               # (8, H2) bf16, row 0 = out weight
        "sm": sm,
        # fc1/fc2 biases omitted on purpose: canceled by batch-stats BN mean subtraction.
    }


def fusion_classifier_forward(a1, a2, s1, s2, packed, *, tile_b=128):
    """Mirrors FusionClassifier.forward(a1, a2, s1, s2) in training-mode BN semantics:
    cat([cat([a1,s1],1), cat([a2,s2],1)],1) -> fc1/bn1/relu -> fc2/bn2/relu -> out -> squeeze."""
    B, E = a1.shape
    in_dim = packed["w1"].shape[0]
    H = packed["w1"].shape[1]
    H2 = packed["w2"].shape[1]
    assert in_dim == 4 * E

    # Concat order matches the torch module exactly: [a1 | s1 | a2 | s2]; bf16 at the boundary.
    x = jnp.concatenate([a1, s1, a2, s2], axis=1).astype(jnp.bfloat16)     # (B, 4E)

    if B > tile_b:
        tb = tile_b
        b_pad = -(-B // tb) * tb
    else:                       # small batch: one full-array tile, no padding / masking
        tb = B
        b_pad = B
    if b_pad != B:
        x = jnp.pad(x, ((0, b_pad - B), (0, 0)))   # padded rows are masked out of BN stats
    n_tiles = b_pad // tb

    kernel = functools.partial(_fusion_kernel, b_real=B, b_padded=b_pad)

    flops = 2 * b_pad * (3 * in_dim * H + 2 * H * H2 + 8 * H2)     # includes phase recompute
    bytes_accessed = (3 * b_pad * in_dim * 2          # x re-read once per phase (bf16)
                      + in_dim * H * 2 + H * H2 * 2 + 8 * H2 * 2   # resident bf16 weights
                      + 8 * H * 4                     # packed small-param slab
                      + b_pad * 4)                    # lane-dense logits out

    out = pl.pallas_call(
        kernel,
        out_shape=jax.ShapeDtypeStruct((1, b_pad), jnp.float32),
        grid_spec=pltpu.PrefetchScalarGridSpec(
            num_scalar_prefetch=0,
            grid=(3, n_tiles),                                       # (phase, batch tile)
            in_specs=[
                pl.BlockSpec((tb, in_dim), lambda p, i: (i, 0)),     # x: batch-tiled
                pl.BlockSpec((in_dim, H), lambda p, i: (0, 0)),      # w1: resident
                pl.BlockSpec((H, H2), lambda p, i: (0, 0)),          # w2: resident
                pl.BlockSpec((8, H2), lambda p, i: (0, 0)),          # w3 rows: resident
                pl.BlockSpec((8, H), lambda p, i: (0, 0)),           # bn/bias slab: resident
            ],
            out_specs=pl.BlockSpec((1, tb), lambda p, i: (0, i)),    # lane-dense logits
            scratch_shapes=[pltpu.VMEM((3, H), jnp.float32),         # bn1 shifted stats
                            pltpu.VMEM((3, H2), jnp.float32)],       # bn2 shifted stats
        ),
        compiler_params=pltpu.CompilerParams(
            dimension_semantics=("arbitrary", "arbitrary"),          # stats carried in scratch
            vmem_limit_bytes=32 * 1024 * 1024,                       # fits v7x 64 MiB physical
        ),
        cost_estimate=pl.CostEstimate(flops=flops, transcendentals=2 * (H + H2),
                                      bytes_accessed=bytes_accessed),
    )(x, packed["w1"], packed["w2"], packed["w3m"], packed["sm"])
    return out[0, :B]   # .squeeze(1)


def init_params(key, emb_dim=32, hidden_dim=64):
    """Deterministic synthetic parameters with the same shapes as the torch module."""
    in_dim = 2 * 2 * emb_dim
    h2 = hidden_dim // 2
    k = jax.random.split(key, 6)
    f32 = jnp.float32
    return {
        # fc1 (bias kept here & in the reference; it has zero effect before batch-stats BN)
        "w1": jax.random.normal(k[0], (in_dim, hidden_dim), f32) * 0.05,
        "b1": jax.random.normal(k[1], (1, hidden_dim), f32) * 0.05,
        "g1": jnp.ones((1, hidden_dim), f32),
        "be1": jnp.zeros((1, hidden_dim), f32),
        # fc2
        "w2": jax.random.normal(k[2], (hidden_dim, h2), f32) * 0.05,
        "b2": jax.random.normal(k[3], (1, h2), f32) * 0.05,
        "g2": jnp.ones((1, h2), f32),
        "be2": jnp.zeros((1, h2), f32),
        # out head
        "w3": jax.random.normal(k[4], (h2, 1), f32) * 0.05,
        "b3": jax.random.normal(k[5], (1, 1), f32) * 0.05,
    }


def reference_forward(a1, a2, s1, s2, p):
    """Pure-JAX reference (torch training-mode BN semantics, same bf16-operand matmul policy).

    Keeps fc1/fc2 biases so the comparison also validates that dropping them inside the
    kernel (before batch-stats BN) is exact."""
    x = jnp.concatenate([a1, s1, a2, s2], axis=1).astype(jnp.float32)

    def mm(h, w):
        return jnp.dot(h.astype(jnp.bfloat16), w.astype(jnp.bfloat16),
                       preferred_element_type=jnp.float32)

    def bn(h, g, b):
        mu = jnp.mean(h, axis=0, keepdims=True)
        var = jnp.mean((h - mu) ** 2, axis=0, keepdims=True)   # biased, like torch training BN
        return (h - mu) / jnp.sqrt(var + BN_EPS) * g + b

    h = mm(x, p["w1"]) + p["b1"]
    h = jnp.maximum(bn(h, p["g1"], p["be1"]), 0.0)
    h = mm(h, p["w2"]) + p["b2"]
    h = jnp.maximum(bn(h, p["g2"], p["be2"]), 0.0)
    return (mm(h, p["w3"]) + p["b3"])[:, 0]


if __name__ == "__main__":
    emb_dim, hidden_dim = 32, 64          # in_dim = 4*emb_dim = 128 = one full MXU contraction
    key = jax.random.PRNGKey(0)
    kp, kd = jax.random.split(key)
    params = init_params(kp, emb_dim=emb_dim, hidden_dim=hidden_dim)
    packed = pack_params(params)

    # batch=8   -> single full-array tile path (no padding / masking)
    # batch=200 -> two 128-row tiles, padded to 256, padded rows masked out of BN stats
    for batch in (8, 200):
        ka1, ka2, ks1, ks2 = jax.random.split(jax.random.fold_in(kd, batch), 4)
        a1 = jax.random.normal(ka1, (batch, emb_dim), jnp.float32)
        a2 = jax.random.normal(ka2, (batch, emb_dim), jnp.float32)
        s1 = jax.random.normal(ks1, (batch, emb_dim), jnp.float32)
        s2 = jax.random.normal(ks2, (batch, emb_dim), jnp.float32)

        out = jax.block_until_ready(fusion_classifier_forward(a1, a2, s1, s2, packed))
        ref = reference_forward(a1, a2, s1, s2, params)
        assert out.shape == (batch,)
        assert jnp.allclose(out, ref, atol=5e-3, rtol=5e-3), (batch, out, ref)

    print("KERNEL_OK")
</pallas_src>

<mosaic_0001>
module attributes {stable_mosaic.version = 11 : i64} {
  func.func @_fusion_kernel(%arg0: i32, %arg1: i32, %arg2: memref<8x128xbf16, #tpu.memory_space<vmem>>, %arg3: memref<128x64xbf16, #tpu.memory_space<vmem>>, %arg4: memref<64x32xbf16, #tpu.memory_space<vmem>>, %arg5: memref<8x32xbf16, #tpu.memory_space<vmem>>, %arg6: memref<8x64xf32, #tpu.memory_space<vmem>>, %arg7: memref<1x8xf32, #tpu.memory_space<vmem>>, %arg8: memref<3x64xf32, #tpu.memory_space<vmem>>, %arg9: memref<3x32xf32, #tpu.memory_space<vmem>>) attributes {dimension_semantics = [#tpu.dimension_semantics<arbitrary>, #tpu.dimension_semantics<arbitrary>], iteration_bounds = array<i64: 3, 1>, scalar_prefetch = 0 : i64, scratch_operands = 2 : i64, tpu.core_type = #tpu.core_type<tc>, window_params = [{transform_indices = @transform_0, window_bounds = array<i64: 8, 128>}, {pipeline_mode = #tpu.pipeline_mode<synchronous>, transform_indices = @transform_1, window_bounds = array<i64: 128, 64>}, {pipeline_mode = #tpu.pipeline_mode<synchronous>, transform_indices = @transform_2, window_bounds = array<i64: 64, 32>}, {pipeline_mode = #tpu.pipeline_mode<synchronous>, transform_indices = @transform_3, window_bounds = array<i64: 8, 32>}, {pipeline_mode = #tpu.pipeline_mode<synchronous>, transform_indices = @transform_4, window_bounds = array<i64: 8, 64>}, {transform_indices = @transform_5, window_bounds = array<i64: 1, 8>}]} {
    %c0 = arith.constant 0 : index
    %c0_0 = arith.constant 0 : index
    %0 = vector.load %arg2[%c0, %c0_0] : memref<8x128xbf16, #tpu.memory_space<vmem>>, vector<8x128xbf16>
    %c0_1 = arith.constant 0 : index
    %c0_2 = arith.constant 0 : index
    %1 = vector.load %arg3[%c0_1, %c0_2] : memref<128x64xbf16, #tpu.memory_space<vmem>>, vector<128x64xbf16>
    %cst = arith.constant dense<0.000000e+00> : vector<8x64xf32>
    %2 = tpu.matmul %0, %1, %cst {dimension_numbers = #tpu.dot_dimension_numbers<[1], [0], [0], [1], [0, 0, 1, 1], [], []>} : vector<8x128xbf16>, vector<128x64xbf16>, vector<8x64xf32> -> vector<8x64xf32>
    %c0_i32 = arith.constant 0 : i32
    %3 = arith.cmpi eq, %arg0, %c0_i32 : i32
    %4 = arith.extui %3 : i1 to i32
    %c0_i32_3 = arith.constant 0 : i32
    %5 = arith.cmpi ne, %4, %c0_i32_3 : i32
    scf.if %5 {
      %c0_i32_6 = arith.constant 0 : i32
      %9 = arith.cmpi eq, %arg1, %c0_i32_6 : i32
      %10 = arith.extui %9 : i1 to i32
      %c0_i32_7 = arith.constant 0 : i32
      %11 = arith.cmpi ne, %10, %c0_i32_7 : i32
      scf.if %11 {
        %26 = vector.extract_strided_slice %2 {offsets = [0, 0], sizes = [1, 64], strides = [1, 1]} : vector<8x64xf32> to vector<1x64xf32>
        %c0_18 = arith.constant 0 : index
        %c0_19 = arith.constant 0 : index
        %27 = vector.load %arg8[%c0_18, %c0_19] : memref<3x64xf32, #tpu.memory_space<vmem>>, vector<1x64xf32>
        tpu.vector_store %arg8[%c0_18, %c0_19], %26 {strides = array<i32>} : memref<3x64xf32, #tpu.memory_space<vmem>>, vector<1x64xf32>,
        %cst_20 = arith.constant 0.000000e+00 : f32
        %28 = vector.broadcast %cst_20 : f32 to vector<2x64xf32>
        %c1_21 = arith.constant 1 : index
        %c0_22 = arith.constant 0 : index
        %29 = vector.load %arg8[%c1_21, %c0_22] : memref<3x64xf32, #tpu.memory_space<vmem>>, vector<2x64xf32>
        tpu.vector_store %arg8[%c1_21, %c0_22], %28 {strides = array<i32>} : memref<3x64xf32, #tpu.memory_space<vmem>>, vector<2x64xf32>,
      } else {
      }
      %c0_8 = arith.constant 0 : index
      %c0_9 = arith.constant 0 : index
      %12 = vector.load %arg8[%c0_8, %c0_9] : memref<3x64xf32, #tpu.memory_space<vmem>>, vector<1x64xf32>
      %13 = vector.broadcast %12 : vector<1x64xf32> to vector<8x64xf32>
      %14 = arith.subf %2, %13 : vector<8x64xf32>
      %c1 = arith.constant 1 : index
      %c0_10 = arith.constant 0 : index
      %15 = vector.load %arg8[%c1, %c0_10] : memref<3x64xf32, #tpu.memory_space<vmem>>, vector<1x64xf32>
      %cst_11 = arith.constant dense<0.000000e+00> : vector<64xf32>
      %16 = vector.multi_reduction <add>, %14, %cst_11 [0] : vector<8x64xf32> to vector<64xf32>
      %17 = vector.shape_cast %16 : vector<64xf32> to vector<1x64xf32>
      %18 = arith.addf %15, %17 : vector<1x64xf32>
      %c1_12 = arith.constant 1 : index
      %c0_13 = arith.constant 0 : index
      %19 = vector.load %arg8[%c1_12, %c0_13] : memref<3x64xf32, #tpu.memory_space<vmem>>, vector<1x64xf32>
      tpu.vector_store %arg8[%c1_12, %c0_13], %18 {strides = array<i32>} : memref<3x64xf32, #tpu.memory_space<vmem>>, vector<1x64xf32>,
      %c2 = arith.constant 2 : index
      %c0_14 = arith.constant 0 : index
      %20 = vector.load %arg8[%c2, %c0_14] : memref<3x64xf32, #tpu.memory_space<vmem>>, vector<1x64xf32>
      %21 = arith.mulf %14, %14 : vector<8x64xf32>
      %cst_15 = arith.constant dense<0.000000e+00> : vector<64xf32>
      %22 = vector.multi_reduction <add>, %21, %cst_15 [0] : vector<8x64xf32> to vector<64xf32>
      %23 = vector.shape_cast %22 : vector<64xf32> to vector<1x64xf32>
      %24 = arith.addf %20, %23 : vector<1x64xf32>
      %c2_16 = arith.constant 2 : index
      %c0_17 = arith.constant 0 : index
      %25 = vector.load %arg8[%c2_16, %c0_17] : memref<3x64xf32, #tpu.memory_space<vmem>>, vector<1x64xf32>
      tpu.vector_store %arg8[%c2_16, %c0_17], %24 {strides = array<i32>} : memref<3x64xf32, #tpu.memory_space<vmem>>, vector<1x64xf32>,
    } else {
    }
    %c0_i32_4 = arith.constant 0 : i32
    %6 = arith.cmpi sgt, %arg0, %c0_i32_4 : i32
    %7 = arith.extui %6 : i1 to i32
    %c0_i32_5 = arith.constant 0 : i32
    %8 = arith.cmpi ne, %7, %c0_i32_5 : i32
    scf.if %8 {
      %c0_6 = arith.constant 0 : index
      %c0_7 = arith.constant 0 : index
      %9 = vector.load %arg6[%c0_6, %c0_7] : memref<8x64xf32, #tpu.memory_space<vmem>>, vector<1x64xf32>
      %c1 = arith.constant 1 : index
      %c0_8 = arith.constant 0 : index
      %10 = vector.load %arg6[%c1, %c0_8] : memref<8x64xf32, #tpu.memory_space<vmem>>, vector<1x64xf32>
      %c1_9 = arith.constant 1 : index
      %c0_10 = arith.constant 0 : index
      %11 = vector.load %arg8[%c1_9, %c0_10] : memref<3x64xf32, #tpu.memory_space<vmem>>, vector<1x64xf32>
      %cst_11 = arith.constant 1.250000e-01 : f32
      %12 = vector.broadcast %cst_11 : f32 to vector<1x64xf32>
      %13 = arith.mulf %11, %12 : vector<1x64xf32>
      %c0_12 = arith.constant 0 : index
      %c0_13 = arith.constant 0 : index
      %14 = vector.load %arg8[%c0_12, %c0_13] : memref<3x64xf32, #tpu.memory_space<vmem>>, vector<1x64xf32>
      %15 = arith.addf %14, %13 : vector<1x64xf32>
      %c2 = arith.constant 2 : index
      %c0_14 = arith.constant 0 : index
      %16 = vector.load %arg8[%c2, %c0_14] : memref<3x64xf32, #tpu.memory_space<vmem>>, vector<1x64xf32>
      %cst_15 = arith.constant 1.250000e-01 : f32
      %17 = vector.broadcast %cst_15 : f32 to vector<1x64xf32>
      %18 = arith.mulf %16, %17 : vector<1x64xf32>
      %19 = arith.mulf %13, %13 : vector<1x64xf32>
      %20 = arith.subf %18, %19 : vector<1x64xf32>
      %cst_16 = arith.constant 0.000000e+00 : f32
      %21 = vector.broadcast %cst_16 : f32 to vector<1x64xf32>
      %22 = arith.maximumf %20, %21 : vector<1x64xf32>
      %23 = vector.broadcast %15 : vector<1x64xf32> to vector<8x64xf32>
      %24 = arith.subf %2, %23 : vector<8x64xf32>
      %cst_17 = arith.constant 9.99999974E-6 : f32
      %25 = vector.broadcast %cst_17 : f32 to vector<1x64xf32>
      %26 = arith.addf %22, %25 : vector<1x64xf32>
      %27 = math.rsqrt %26 : vector<1x64xf32>
      %28 = vector.broadcast %27 : vector<1x64xf32> to vector<8x64xf32>
      %29 = arith.mulf %24, %28 : vector<8x64xf32>
      %30 = vector.broadcast %9 : vector<1x64xf32> to vector<8x64xf32>
      %31 = arith.mulf %29, %30 : vector<8x64xf32>
      %32 = vector.broadcast %10 : vector<1x64xf32> to vector<8x64xf32>
      %33 = arith.addf %31, %32 : vector<8x64xf32>
      %cst_18 = arith.constant 0.000000e+00 : f32
      %34 = vector.broadcast %cst_18 : f32 to vector<8x64xf32>
      %35 = arith.maximumf %33, %34 : vector<8x64xf32>
      %36 = arith.truncf %35 : vector<8x64xf32> to vector<8x64xbf16>
      %c0_19 = arith.constant 0 : index
      %c0_20 = arith.constant 0 : index
      %37 = vector.load %arg4[%c0_19, %c0_20] : memref<64x32xbf16, #tpu.memory_space<vmem>>, vector<64x32xbf16>
      %cst_21 = arith.constant dense<0.000000e+00> : vector<8x32xf32>
      %38 = tpu.matmul %36, %37, %cst_21 {dimension_numbers = #tpu.dot_dimension_numbers<[1], [0], [0], [1], [0, 0, 1, 1], [], []>} : vector<8x64xbf16>, vector<64x32xbf16>, vector<8x32xf32> -> vector<8x32xf32>
      %c1_i32 = arith.constant 1 : i32
      %39 = arith.cmpi eq, %arg0, %c1_i32 : i32
      %40 = arith.extui %39 : i1 to i32
      %c0_i32_22 = arith.constant 0 : i32
      %41 = arith.cmpi ne, %40, %c0_i32_22 : i32
      scf.if %41 {
        %c0_i32_24 = arith.constant 0 : i32
        %45 = arith.cmpi eq, %arg1, %c0_i32_24 : i32
        %46 = arith.extui %45 : i1 to i32
        %c0_i32_25 = arith.constant 0 : i32
        %47 = arith.cmpi ne, %46, %c0_i32_25 : i32
        scf.if %47 {
          %62 = vector.extract_strided_slice %38 {offsets = [0, 0], sizes = [1, 32], strides = [1, 1]} : vector<8x32xf32> to vector<1x32xf32>
          %c0_38 = arith.constant 0 : index
          %c0_39 = arith.constant 0 : index
          %63 = vector.load %arg9[%c0_38, %c0_39] : memref<3x32xf32, #tpu.memory_space<vmem>>, vector<1x32xf32>
          tpu.vector_store %arg9[%c0_38, %c0_39], %62 {strides = array<i32>} : memref<3x32xf32, #tpu.memory_space<vmem>>, vector<1x32xf32>,
          %cst_40 = arith.constant 0.000000e+00 : f32
          %64 = vector.broadcast %cst_40 : f32 to vector<2x32xf32>
          %c1_41 = arith.constant 1 : index
          %c0_42 = arith.constant 0 : index
          %65 = vector.load %arg9[%c1_41, %c0_42] : memref<3x32xf32, #tpu.memory_space<vmem>>, vector<2x32xf32>
          tpu.vector_store %arg9[%c1_41, %c0_42], %64 {strides = array<i32>} : memref<3x32xf32, #tpu.memory_space<vmem>>, vector<2x32xf32>,
        } else {
        }
        %c0_26 = arith.constant 0 : index
        %c0_27 = arith.constant 0 : index
        %48 = vector.load %arg9[%c0_26, %c0_27] : memref<3x32xf32, #tpu.memory_space<vmem>>, vector<1x32xf32>
        %49 = vector.broadcast %48 : vector<1x32xf32> to vector<8x32xf32>
        %50 = arith.subf %38, %49 : vector<8x32xf32>
        %c1_28 = arith.constant 1 : index
        %c0_29 = arith.constant 0 : index
        %51 = vector.load %arg9[%c1_28, %c0_29] : memref<3x32xf32, #tpu.memory_space<vmem>>, vector<1x32xf32>
        %cst_30 = arith.constant dense<0.000000e+00> : vector<32xf32>
        %52 = vector.multi_reduction <add>, %50, %cst_30 [0] : vector<8x32xf32> to vector<32xf32>
        %53 = vector.shape_cast %52 : vector<32xf32> to vector<1x32xf32>
        %54 = arith.addf %51, %53 : vector<1x32xf32>
        %c1_31 = arith.constant 1 : index
        %c0_32 = arith.constant 0 : index
        %55 = vector.load %arg9[%c1_31, %c0_32] : memref<3x32xf32, #tpu.memory_space<vmem>>, vector<1x32xf32>
        tpu.vector_store %arg9[%c1_31, %c0_32], %54 {strides = array<i32>} : memref<3x32xf32, #tpu.memory_space<vmem>>, vector<1x32xf32>,
        %c2_33 = arith.constant 2 : index
        %c0_34 = arith.constant 0 : index
        %56 = vector.load %arg9[%c2_33, %c0_34] : memref<3x32xf32, #tpu.memory_space<vmem>>, vector<1x32xf32>
        %57 = arith.mulf %50, %50 : vector<8x32xf32>
        %cst_35 = arith.constant dense<0.000000e+00> : vector<32xf32>
        %58 = vector.multi_reduction <add>, %57, %cst_35 [0] : vector<8x32xf32> to vector<32xf32>
        %59 = vector.shape_cast %58 : vector<32xf32> to vector<1x32xf32>
        %60 = arith.addf %56, %59 : vector<1x32xf32>
        %c2_36 = arith.constant 2 : index
        %c0_37 = arith.constant 0 : index
        %61 = vector.load %arg9[%c2_36, %c0_37] : memref<3x32xf32, #tpu.memory_space<vmem>>, vector<1x32xf32>
        tpu.vector_store %arg9[%c2_36, %c0_37], %60 {strides = array<i32>} : memref<3x32xf32, #tpu.memory_space<vmem>>, vector<1x32xf32>,
      } else {
      }
      %c2_i32 = arith.constant 2 : i32
      %42 = arith.cmpi eq, %arg0, %c2_i32 : i32
      %43 = arith.extui %42 : i1 to i32
      %c0_i32_23 = arith.constant 0 : i32
      %44 = arith.cmpi ne, %43, %c0_i32_23 : i32
      scf.if %44 {
        %c2_24 = arith.constant 2 : index
        %c0_25 = arith.constant 0 : index
        %45 = vector.load %arg6[%c2_24, %c0_25] : memref<8x64xf32, #tpu.memory_space<vmem>>, vector<1x32xf32>
        %c3 = arith.constant 3 : index
        %c0_26 = arith.constant 0 : index
        %46 = vector.load %arg6[%c3, %c0_26] : memref<8x64xf32, #tpu.memory_space<vmem>>, vector<1x32xf32>
        %c1_27 = arith.constant 1 : index
        %c0_28 = arith.constant 0 : index
        %47 = vector.load %arg9[%c1_27, %c0_28] : memref<3x32xf32, #tpu.memory_space<vmem>>, vector<1x32xf32>
        %cst_29 = arith.constant 1.250000e-01 : f32
        %48 = vector.broadcast %cst_29 : f32 to vector<1x32xf32>
        %49 = arith.mulf %47, %48 : vector<1x32xf32>
        %c0_30 = arith.constant 0 : index
        %c0_31 = arith.constant 0 : index
        %50 = vector.load %arg9[%c0_30, %c0_31] : memref<3x32xf32, #tpu.memory_space<vmem>>, vector<1x32xf32>
        %51 = arith.addf %50, %49 : vector<1x32xf32>
        %c2_32 = arith.constant 2 : index
        %c0_33 = arith.constant 0 : index
        %52 = vector.load %arg9[%c2_32, %c0_33] : memref<3x32xf32, #tpu.memory_space<vmem>>, vector<1x32xf32>
        %cst_34 = arith.constant 1.250000e-01 : f32
        %53 = vector.broadcast %cst_34 : f32 to vector<1x32xf32>
        %54 = arith.mulf %52, %53 : vector<1x32xf32>
        %55 = arith.mulf %49, %49 : vector<1x32xf32>
        %56 = arith.subf %54, %55 : vector<1x32xf32>
        %cst_35 = arith.constant 0.000000e+00 : f32
        %57 = vector.broadcast %cst_35 : f32 to vector<1x32xf32>
        %58 = arith.maximumf %56, %57 : vector<1x32xf32>
        %59 = vector.broadcast %51 : vector<1x32xf32> to vector<8x32xf32>
        %60 = arith.subf %38, %59 : vector<8x32xf32>
        %cst_36 = arith.constant 9.99999974E-6 : f32
        %61 = vector.broadcast %cst_36 : f32 to vector<1x32xf32>
        %62 = arith.addf %58, %61 : vector<1x32xf32>
        %63 = math.rsqrt %62 : vector<1x32xf32>
        %64 = vector.broadcast %63 : vector<1x32xf32> to vector<8x32xf32>
        %65 = arith.mulf %60, %64 : vector<8x32xf32>
        %66 = vector.broadcast %45 : vector<1x32xf32> to vector<8x32xf32>
        %67 = arith.mulf %65, %66 : vector<8x32xf32>
        %68 = vector.broadcast %46 : vector<1x32xf32> to vector<8x32xf32>
        %69 = arith.addf %67, %68 : vector<8x32xf32>
        %cst_37 = arith.constant 0.000000e+00 : f32
        %70 = vector.broadcast %cst_37 : f32 to vector<8x32xf32>
        %71 = arith.maximumf %69, %70 : vector<8x32xf32>
        %c0_38 = arith.constant 0 : index
        %c0_39 = arith.constant 0 : index
        %72 = vector.load %arg5[%c0_38, %c0_39] : memref<8x32xbf16, #tpu.memory_space<vmem>>, vector<8x32xbf16>
        %73 = arith.truncf %71 : vector<8x32xf32> to vector<8x32xbf16>
        %cst_40 = arith.constant dense<0.000000e+00> : vector<8x8xf32>
        %74 = tpu.matmul %72, %73, %cst_40 {dimension_numbers = #tpu.dot_dimension_numbers<[1], [1], [0], [0], [0, 0, 1, 0], [], []>} : vector<8x32xbf16>, vector<8x32xbf16>, vector<8x8xf32> -> vector<8x8xf32>
        %75 = vector.extract_strided_slice %74 {offsets = [0, 0], sizes = [1, 8], strides = [1, 1]} : vector<8x8xf32> to vector<1x8xf32>
        %c4 = arith.constant 4 : index
        %c0_41 = arith.constant 0 : index
        %76 = vector.load %arg6[%c4, %c0_41] : memref<8x64xf32, #tpu.memory_space<vmem>>, vector<1x1xf32>
        %77 = vector.broadcast %76 : vector<1x1xf32> to vector<1x8xf32>
        %78 = arith.addf %75, %77 : vector<1x8xf32>
        %c0_42 = arith.constant 0 : index
        %c0_43 = arith.constant 0 : index
        %79 = vector.load %arg7[%c0_42, %c0_43] : memref<1x8xf32, #tpu.memory_space<vmem>>, vector<1x8xf32>
        tpu.vector_store %arg7[%c0_42, %c0_43], %78 {strides = array<i32>} : memref<1x8xf32, #tpu.memory_space<vmem>>, vector<1x8xf32>,
      } else {
      }
    } else {
    }
    return
  }
  func.func @transform_0(%arg0: i32, %arg1: i32) -> (i32, i32) {
    %c0_i32 = arith.constant 0 : i32
    %c0_i32_0 = arith.constant 0 : i32
    return %arg1, %c0_i32 : i32, i32
  }
  func.func @transform_1(%arg0: i32, %arg1: i32) -> (i32, i32) {
    %c0_i32 = arith.constant 0 : i32
    %c0_i32_0 = arith.constant 0 : i32
    %c0_i32_1 = arith.constant 0 : i32
    return %c0_i32, %c0_i32_0 : i32, i32
  }
  func.func @transform_2(%arg0: i32, %arg1: i32) -> (i32, i32) {
    %c0_i32 = arith.constant 0 : i32
    %c0_i32_0 = arith.constant 0 : i32
    %c0_i32_1 = arith.constant 0 : i32
    return %c0_i32, %c0_i32_0 : i32, i32
  }
  func.func @transform_3(%arg0: i32, %arg1: i32) -> (i32, i32) {
    %c0_i32 = arith.constant 0 : i32
    %c0_i32_0 = arith.constant 0 : i32
    %c0_i32_1 = arith.constant 0 : i32
    return %c0_i32, %c0_i32_0 : i32, i32
  }
  func.func @transform_4(%arg0: i32, %arg1: i32) -> (i32, i32) {
    %c0_i32 = arith.constant 0 : i32
    %c0_i32_0 = arith.constant 0 : i32
    %c0_i32_1 = arith.constant 0 : i32
    return %c0_i32, %c0_i32_0 : i32, i32
  }
  func.func @transform_5(%arg0: i32, %arg1: i32) -> (i32, i32) {
    %c0_i32 = arith.constant 0 : i32
    %c0_i32_0 = arith.constant 0 : i32
    return %c0_i32, %arg1 : i32, i32
  }
}

</mosaic_0001>

<llo_original>
// kernel: tpu_custom_call.1
$region0: #{tpu_custom_call.1}
  #allocation0 [shape = 'u32[]', space=smem, size = 0x4, offset = 0x4, fixed_abs, tag = 'smem constant byte address 0x4 - core index']
  #allocation1 [shape = 'u32[72,128]{1,0:T(1,128)}', space=vmem, size = 0x9000, scoped, tag = 'internal scratch']
  #allocation2 [shape = 'f32[3,64]{1,0:T(4,128)}', space=vmem, size = 0x800, scoped, tag = 'scratch operand']
  #allocation3 [shape = 'f32[3,32]{1,0:T(4,128)}', space=vmem, size = 0x800, scoped, tag = 'scratch operand']
  %s0 = inlined_call_operand.vmem [shape: bf16[8,128], index: 0, kind: input, shape index: {}]
  %s1 = inlined_call_operand.vmem [shape: bf16[128,64], index: 1, kind: input, shape index: {}]
  %s2 = inlined_call_operand.vmem [shape: bf16[64,32], index: 2, kind: input, shape index: {}]
  %s3 = inlined_call_operand.vmem [shape: bf16[8,32], index: 3, kind: input, shape index: {}]
  %s4 = inlined_call_operand.vmem [shape: f32[8,64], index: 4, kind: input, shape index: {}]
  %s5 = inlined_call_operand.hbm [shape: f32[1,8], index: 5, kind: output, shape index: {}]
  %s6 = sld [smem:[#allocation0]]
  $region77: #{tpu_custom_call.1} parent=0
    _
  %s8 = ssub.s32 1, %s6
  %s9 = scalar_select 0, %s8, %s6
  $region1: #{tpu_custom_call.1} parent=0
    #allocation4 [shape = 'u8[512]{0}', space=vmem, size = 0x400, scoped, tag = 'output window, operand 0, single buffered']
    #allocation5 [shape = 's32[2]{0}', space=sflag, size = 0x8, scoped, tag = 'scoped memory for tpu_custom_call.1']
    %10 = vsyncpa [#allocation5], 0
    loop: start=0, step=1, limit=5
    $region2: #{tpu_custom_call.1} parent=1 // loop_pre_header
      _
    $region3: #{tpu_custom_call.1} parent=1 // loop_header
      %s12 = sphi 0, %s16
      %p13 = scmp.ge.s32.totalorder %s12, 5
      %s19 = sphi 0, %s31
      %s20 = sphi 0, %s27
      %s21 = sphi 0, %s19
      %s22 = sphi 0, %s20
      %s23 = sphi 0, %s21
      %s24 = sphi 0, %s22
      %s34 = sphi 0, %s36
      %s37 = sphi 0, %s34
      %s38 = sphi 0, %s37
      %s54 = sphi 0, %s38
      %s58 = sphi 0, %s58
      %s60 = sphi 0, %s58
      %s61 = sphi 0, %s60
      %s75 = sphi 0, %s61
      %s79 = sphi 0, %s79
      %s81 = sphi 0, %s79
      %s82 = sphi 0, %s81
      %s96 = sphi 0, %s82
      %s100 = sphi 0, %s100
      %s102 = sphi 0, %s100
      %s103 = sphi 0, %s102
      %s117 = sphi 0, %s103
      %s121 = sphi 0, %s121
      %s123 = sphi 0, %s121
      %s124 = sphi 0, %s123
      %s138 = sphi 0, %s124
      %s144 = sphi 0, %s146
      %s147 = sphi 0, %s144
      %s148 = sphi 0, %s147
      %s164 = sphi 0, %s148
    $region4: #{tpu_custom_call.1} parent=1 // loop_header_branch
      %15 = sbr.rel (%p13) target = $region8
    $region5: #{tpu_custom_call.1} parent=1 // loop_body
      %s17 = ssub.s32 %s12, 1
      %s18 = ssub.s32 %s12, 2
      %s25 = sadd.s32 1, %s20
      %p26 = scmp.ge.s32.totalorder %s25, 1
      %s27 = scalar_select %p26, 0, %s25
      %s28 = sadd.s32 1, %s19
      %s29 = scalar_select %p26, %s28, %s19
      %p30 = scmp.ge.s32.totalorder %s29, 3
      %s31 = scalar_select %p30, 0, %s29
      %s32 = ssub.s32 %s20, %s27
      %p33 = scmp.eq.s32.totalorder %s32, 0
      %s35 = sadd.s32 %s34, 1
      %s36 = scalar_select %p33, %s34, %s35
      %p39 = pneg %p33
      %p40 = scmp.eq.s32.totalorder %s12, 2
      %p41 = por %p39, %p40
      %p42 = scmp.ne.s32.totalorder %s34, %s37
      %p43 = scmp.eq.s32.totalorder %s12, 0
      %p44 = por %p42, %p43
      %p45 = scmp.ne.s32.totalorder %s34, %s37
      %p46 = scmp.eq.s32.totalorder %s17, 2
      %p47 = por %p45, %p46
      %p48 = scmp.ne.s32.totalorder %s37, %s38
      %p49 = scmp.eq.s32.totalorder %s17, 0
      %p50 = por %p48, %p49
      %p51 = scmp.ne.s32.totalorder %s37, %s38
      %p52 = scmp.eq.s32.totalorder %s18, 2
      %p53 = por %p51, %p52
      %p55 = scmp.ne.s32.totalorder %s38, %s54
      %p56 = scmp.eq.s32.totalorder %s18, 0
      %p57 = por %p55, %p56
      %s59 = sadd.s32 %s58, 1
      %p62 = scmp.eq.s32.totalorder %s12, 2
      %p63 = scmp.ne.s32.totalorder %s58, %s60
      %p64 = scmp.eq.s32.totalorder %s12, 0
      %p65 = por %p63, %p64
      %p66 = scmp.ne.s32.totalorder %s58, %s60
      %p67 = scmp.eq.s32.totalorder %s17, 2
      %p68 = por %p66, %p67
      %p69 = scmp.ne.s32.totalorder %s60, %s61
      %p70 = scmp.eq.s32.totalorder %s17, 0
      %p71 = por %p69, %p70
      %p72 = scmp.ne.s32.totalorder %s60, %s61
      %p73 = scmp.eq.s32.totalorder %s18, 2
      %p74 = por %p72, %p73
      %p76 = scmp.ne.s32.totalorder %s61, %s75
      %p77 = scmp.eq.s32.totalorder %s18, 0
      %p78 = por %p76, %p77
      %s80 = sadd.s32 %s79, 1
      %p83 = scmp.eq.s32.totalorder %s12, 2
      %p84 = scmp.ne.s32.totalorder %s79, %s81
      %p85 = scmp.eq.s32.totalorder %s12, 0
      %p86 = por %p84, %p85
      %p87 = scmp.ne.s32.totalorder %s79, %s81
      %p88 = scmp.eq.s32.totalorder %s17, 2
      %p89 = por %p87, %p88
      %p90 = scmp.ne.s32.totalorder %s81, %s82
      %p91 = scmp.eq.s32.totalorder %s17, 0
      %p92 = por %p90, %p91
      %p93 = scmp.ne.s32.totalorder %s81, %s82
      %p94 = scmp.eq.s32.totalorder %s18, 2
      %p95 = por %p93, %p94
      %p97 = scmp.ne.s32.totalorder %s82, %s96
      %p98 = scmp.eq.s32.totalorder %s18, 0
      %p99 = por %p97, %p98
      %s101 = sadd.s32 %s100, 1
      %p104 = scmp.eq.s32.totalorder %s12, 2
      %p105 = scmp.ne.s32.totalorder %s100, %s102
      %p106 = scmp.eq.s32.totalorder %s12, 0
      %p107 = por %p105, %p106
      %p108 = scmp.ne.s32.totalorder %s100, %s102
      %p109 = scmp.eq.s32.totalorder %s17, 2
      %p110 = por %p108, %p109
      %p111 = scmp.ne.s32.totalorder %s102, %s103
      %p112 = scmp.eq.s32.totalorder %s17, 0
      %p113 = por %p111, %p112
      %p114 = scmp.ne.s32.totalorder %s102, %s103
      %p115 = scmp.eq.s32.totalorder %s18, 2
      %p116 = por %p114, %p115
      %p118 = scmp.ne.s32.totalorder %s103, %s117
      %p119 = scmp.eq.s32.totalorder %s18, 0
      %p120 = por %p118, %p119
      %s122 = sadd.s32 %s121, 1
      %p125 = scmp.eq.s32.totalorder %s12, 2
      %p126 = scmp.ne.s32.totalorder %s121, %s123
      %p127 = scmp.eq.s32.totalorder %s12, 0
      %p128 = por %p126, %p127
      %p129 = scmp.ne.s32.totalorder %s121, %s123
      %p130 = scmp.eq.s32.totalorder %s17, 2
      %p131 = por %p129, %p130
      %p132 = scmp.ne.s32.totalorder %s123, %s124
      %p133 = scmp.eq.s32.totalorder %s17, 0
      %p134 = por %p132, %p133
      %p135 = scmp.ne.s32.totalorder %s123, %s124
      %p136 = scmp.eq.s32.totalorder %s18, 2
      %p137 = por %p135, %p136
      %p139 = scmp.ne.s32.totalorder %s124, %s138
      %p140 = scmp.eq.s32.totalorder %s18, 0
      %p141 = por %p139, %p140
      %s142 = ssub.s32 %s20, %s27
      %p143 = scmp.eq.s32.totalorder %s142, 0
      %s145 = sadd.s32 %s144, 1
      %s146 = scalar_select %p143, %s144, %s145
      %p149 = pneg %p143
      %p150 = scmp.eq.s32.totalorder %s12, 2
      %p151 = por %p149, %p150
      %p152 = scmp.ne.s32.totalorder %s144, %s147
      %p153 = scmp.eq.s32.totalorder %s12, 0
      %p154 = por %p152, %p153
      %p155 = scmp.ne.s32.totalorder %s144, %s147
      %p156 = scmp.eq.s32.totalorder %s17, 2
      %p157 = por %p155, %p156
      %p158 = scmp.ne.s32.totalorder %s147, %s148
      %p159 = scmp.eq.s32.totalorder %s17, 0
      %p160 = por %p158, %p159
      %p161 = scmp.ne.s32.totalorder %s147, %s148
      %p162 = scmp.eq.s32.totalorder %s18, 2
      %p163 = por %p161, %p162
      %p165 = scmp.ne.s32.totalorder %s148, %s164
      %p166 = scmp.eq.s32.totalorder %s18, 0
      %p167 = por %p165, %p166
      %p168 = scmp.le.s32.totalorder 1, %s12
      %p169 = scmp.lt.s32.totalorder %s12, 4
      %p170 = pnand %p168, %p169
      %p171 = pneg %p170
      // Predicated region
      $region9: #{tpu_custom_call.1} parent=5 // pred_check
        _
      $region10: #{tpu_custom_call.1} parent=5 // pred_check_branch
        %173 = sbr.rel (%p170) target = $region12
      $region11: #{tpu_custom_call.1} parent=5 // pred_region
        %s174 = ssub.s32 %s12, 1
        // Predicated region
        $region13: #{tpu_custom_call.1} parent=11 // pred_check
          %p175 = pneg %p50
        $region14: #{tpu_custom_call.1} parent=11 // pred_check_branch
          %177 = sbr.rel (%p175) target = $region16
        $region15: #{tpu_custom_call.1} parent=11 // pred_region
          %p178 = scmp.lt.s32.totalorder %s22, 0
          %s179 = scalar_select %p178, %s22, 0
          %s180 = smul.addr %s179, 4
          %s181 = scalar_lea.vmem %s0, %s180
        $region16: #{tpu_custom_call.1} parent=11 // pred_fallthru
          _
        // Predicated region
        $region17: #{tpu_custom_call.1} parent=11 // pred_check
          %p182 = pneg %p71
        $region18: #{tpu_custom_call.1} parent=11 // pred_check_branch
          %184 = sbr.rel (%p182) target = $region20
        $region19: #{tpu_custom_call.1} parent=11 // pred_region
          _
        $region20: #{tpu_custom_call.1} parent=11 // pred_fallthru
          _
        // Predicated region
        $region21: #{tpu_custom_call.1} parent=11 // pred_check
          %p185 = pneg %p92
        $region22: #{tpu_custom_call.1} parent=11 // pred_check_branch
          %187 = sbr.rel (%p185) target = $region24
        $region23: #{tpu_custom_call.1} parent=11 // pred_region
          _
        $region24: #{tpu_custom_call.1} parent=11 // pred_fallthru
          _
        // Predicated region
        $region25: #{tpu_custom_call.1} parent=11 // pred_check
          %p188 = pneg %p113
        $region26: #{tpu_custom_call.1} parent=11 // pred_check_branch
          %190 = sbr.rel (%p188) target = $region28
        $region27: #{tpu_custom_call.1} parent=11 // pred_region
          _
        $region28: #{tpu_custom_call.1} parent=11 // pred_fallthru
          _
        // Predicated region
        $region29: #{tpu_custom_call.1} parent=11 // pred_check
          %p191 = pneg %p134
        $region30: #{tpu_custom_call.1} parent=11 // pred_check_branch
          %193 = sbr.rel (%p191) target = $region32
        $region31: #{tpu_custom_call.1} parent=11 // pred_region
          _
        $region32: #{tpu_custom_call.1} parent=11 // pred_fallthru
          _
      $region12: #{tpu_custom_call.1} parent=5 // pred_fallthru
        _
      %p194 = scmp.lt.s32.totalorder %s12, 3
      // Predicated region
      $region33: #{tpu_custom_call.1} parent=5 // pred_check
        %p195 = pneg %p194
      $region34: #{tpu_custom_call.1} parent=5 // pred_check_branch
        %197 = sbr.rel (%p195) target = $region36
      $region35: #{tpu_custom_call.1} parent=5 // pred_region
        _
      $region36: #{tpu_custom_call.1} parent=5 // pred_fallthru
        _
      %p198 = scmp.le.s32.totalorder 1, %s12
      %p199 = scmp.lt.s32.totalorder %s12, 4
      %p200 = pnand %p198, %p199
      %p201 = pneg %p200
      // Predicated region
      $region37: #{tpu_custom_call.1} parent=5 // pred_check
        _
      $region38: #{tpu_custom_call.1} parent=5 // pred_check_branch
        %203 = sbr.rel (%p200) target = $region40
      $region39: #{tpu_custom_call.1} parent=5 // pred_region
        %s204 = ssub.s32 %s12, 1
        %p205 = scmp.lt.s32.totalorder %s22, 0
        %s206 = scalar_select %p205, %s22, 0
        %s207 = smul.addr %s206, 4
        %s208 = scalar_lea.vmem %s0, %s207
        %p209 = pneg %p50
        %p210 = pneg %p47
        %p211 = pneg %p71
        %p212 = pneg %p68
        %p213 = pneg %p92
        %p214 = pneg %p89
        %p215 = pneg %p113
        %p216 = pneg %p110
        %p217 = pneg %p134
        %p218 = pneg %p131
        %p219 = pneg %p160
        %p220 = pneg %p157
        %p221 = scmp.lt.s32.totalorder %s22, 0
        %s222 = scalar_select %p221, %s22, 0
        %s223 = smul.addr %s222, 4
        %s224 = scalar_lea.vmem %s0, %s223
        %v226 = vld [vmem:[%s224] sm:$0xf]
        %v227 = vld [vmem:[%s1] sm:$0xf]
        %v228 = vld [vmem:[%s1 + $0x4] sm:$0xf]
        %v229 = vld [vmem:[%s1 + $0x8] sm:$0xf]
        %v230 = vld [vmem:[%s1 + $0xc] sm:$0xf]
        %v231 = vld [vmem:[%s1 + $0x10] sm:$0xf]
        %v232 = vld [vmem:[%s1 + $0x14] sm:$0xf]
        %v233 = vld [vmem:[%s1 + $0x18] sm:$0xf]
        %v234 = vld [vmem:[%s1 + $0x1c] sm:$0xf]
        %v235 = vld [vmem:[%s1 + $0x20] sm:$0xf]
        %v236 = vld [vmem:[%s1 + $0x24] sm:$0xf]
        %v237 = vld [vmem:[%s1 + $0x28] sm:$0xf]
        %v238 = vld [vmem:[%s1 + $0x2c] sm:$0xf]
        %v239 = vld [vmem:[%s1 + $0x30] sm:$0xf]
        %v240 = vld [vmem:[%s1 + $0x34] sm:$0xf]
        %v241 = vld [vmem:[%s1 + $0x38] sm:$0xf]
        %v242 = vld [vmem:[%s1 + $0x3c] sm:$0xf]
        %v259 = vunpack.c.l.b16 %v227
        %v260 = vunpack.c.l.b16 %v228
        %v261 = vunpack.c.l.b16 %v229
        %v262 = vunpack.c.l.b16 %v230
        %v263 = vunpack.c.l.b16 %v231
        %v264 = vunpack.c.l.b16 %v232
        %v265 = vunpack.c.l.b16 %v233
        %v266 = vunpack.c.l.b16 %v234
        %v267 = vunpack.c.l.b16 %v235
        %v268 = vunpack.c.l.b16 %v236
        %v269 = vunpack.c.l.b16 %v237
        %v270 = vunpack.c.l.b16 %v238
        %v271 = vunpack.c.l.b16 %v239
        %v272 = vunpack.c.l.b16 %v240
        %v273 = vunpack.c.l.b16 %v241
        %v274 = vunpack.c.l.b16 %v242
        %v275 = vpack.c.b16 %v260, %v259
        %v276 = vpack.c.b16 %v262, %v261
        %v277 = vpack.c.b16 %v264, %v263
        %v278 = vpack.c.b16 %v266, %v265
        %v279 = vpack.c.b16 %v268, %v267
        %v280 = vpack.c.b16 %v270, %v269
        %v281 = vpack.c.b16 %v272, %v271
        %v282 = vpack.c.b16 %v274, %v273
        %291 = vmatpush.bf16.msra.mxu0 %v282
        %292 = vmatpush.bf16.msra.mxu0 %v281
        %293 = vmatpush.bf16.msra.mxu0 %v280
        %294 = vmatpush.bf16.msra.mxu0 %v279
        %295 = vmatpush.bf16.msra.mxu0 %v278
        %296 = vmatpush.bf16.msra.mxu0 %v277
        %297 = vmatpush.bf16.msra.mxu0 %v276
        %298 = vmatpush.bf16.msra.mxu0 %v275
        %299 = vmatmul.bf16.gmra.mxu0 %v226
        %v300 = vpop.f32.mrf.mxu0
        %v301 = vadd.f32 0.0, %v300
        %v302 = vpop.f32.mrf.mxu0
        %303 = vdwg.mxu0
        %p304 = scmp.eq.s32.totalorder %s21, 0
        // Predicated region
        $region41: #{tpu_custom_call.1} parent=39 // pred_check
          %p305 = pneg %p304
        $region42: #{tpu_custom_call.1} parent=39 // pred_check_branch
          %307 = sbr.rel (%p305) target = $region44
        $region43: #{tpu_custom_call.1} parent=39 // pred_region
          %p308 = scmp.eq.s32.totalorder %s22, 0
          // Predicated region
          $region45: #{tpu_custom_call.1} parent=43 // pred_check
            %p309 = pneg %p308
          $region46: #{tpu_custom_call.1} parent=43 // pred_check_branch
            %311 = sbr.rel (%p309) target = $region48
          $region47: #{tpu_custom_call.1} parent=43 // pred_region
            %vm312 = vcmask 516096
            %313 = vst.msk [vmem:[#allocation2] sm:$0x1] %vm312, %v301
            %vm314 = vcmask 517120
            %315 = vst.msk [vmem:[#allocation2 + $0x1] sm:$0x3] %vm314, 0.0
          $region48: #{tpu_custom_call.1} parent=43 // pred_fallthru
            _
          %v316 = vld [vmem:[#allocation2] sm:$0x1]
          %v317 = vperm.slane %v316, 0
          %v318 = vsub.f32 %v301, %v317
          %v319 = vld [vmem:[#allocation2 + $0x1] sm:$0x1]
          %vm320 = vcmask 523264
          %v321 = vsel %vm320, %v318, 0.0
          %v322 = vrot.slane %v321, 4
          %v323 = vadd.f32 %v321, %v322
          %v324 = vrot.slane %v323, 2
          %v325 = vadd.f32 %v323, %v324
          %v326 = vrot.slane %v325, 1
          %v327 = vadd.f32 %v325, %v326
          %v328 = vadd.f32 %v319, %v327
          %vm329 = vcmask 516096
          %330 = vst.msk [vmem:[#allocation2 + $0x1] sm:$0x1] %vm329, %v328
          %v331 = vld [vmem:[#allocation2 + $0x2] sm:$0x1]
          %v332 = vmul.f32 %v318, %v318
          %v333 = vsel %vm320, %v332, 0.0
          %v334 = vrot.slane %v333, 4
          %v335 = vadd.f32 %v333, %v334
          %v336 = vrot.slane %v335, 2
          %v337 = vadd.f32 %v335, %v336
          %v338 = vrot.slane %v337, 1
          %v339 = vadd.f32 %v337, %v338
          %v340 = vadd.f32 %v331, %v339
          %341 = vst.msk [vmem:[#allocation2 + $0x2] sm:$0x1] %vm329, %v340
        $region44: #{tpu_custom_call.1} parent=39 // pred_fallthru
          _
        %p342 = scmp.gt.s32.totalorder %s21, 0
        // Predicated region
        $region49: #{tpu_custom_call.1} parent=39 // pred_check
          %p343 = pneg %p342
        $region50: #{tpu_custom_call.1} parent=39 // pred_check_branch
          %345 = sbr.rel (%p343) target = $region52
        $region51: #{tpu_custom_call.1} parent=39 // pred_region
          %v346 = vld [vmem:[%s4] sm:$0x1]
          %v347 = vld [vmem:[%s4 + $0x1] sm:$0x1]
          %v348 = vld [vmem:[#allocation2 + $0x1] sm:$0x1]
          %v349 = vmul.f32 %v348, 0.125
          %v350 = vld [vmem:[#allocation2] sm:$0x1]
          %v351 = vadd.f32 %v350, %v349
          %v352 = vld [vmem:[#allocation2 + $0x2] sm:$0x1]
          %v353 = vmul.f32 %v352, 0.125
          %v354 = vmul.f32 %v349, %v349
          %v355 = vsub.f32 %v353, %v354
          %v356 = vmax.f32 %v355, 0.0
          %v357 = vperm.slane %v351, 0
          %v358 = vsub.f32 %v301, %v357
          %v359 = vadd.f32 %v356, 1e-05
          %v360 = vrsqrt.pop %v359
          %v361 = vmul.f32 %v360, %v359
          %v362 = vmul.f32 %v361, %v360
          %v363 = vmul.f32 0.5, %v362
          %v364 = vsub.f32 1.5, %v363
          %v365 = vmul.f32 %v360, %v364
          %vm366 = vweird.f32 %v359
          %vm367 = vweird.f32 %v360
          %vm368 = vmor %vm366, %vm367
          %v369 = vsel %vm368, %v360, %v365
          %v370 = vperm.slane %v369, 0
          %v371 = vmul.f32 %v358, %v370
          %v372 = vperm.slane %v346, 0
          %v373 = vmul.f32 %v371, %v372
          %v374 = vperm.slane %v347, 0
          %v375 = vadd.f32 %v373, %v374
          %v376 = vmax.f32 %v375, 0.0
          %v377 = vpack.c.bf16 %v376, %v376
          %v378 = vld [vmem:[%s2] sm:$0xf]
          %v379 = vld [vmem:[%s2 + $0x4] sm:$0xf]
          %v380 = vld [vmem:[%s2 + $0x8] sm:$0xf]
          %v381 = vld [vmem:[%s2 + $0xc] sm:$0xf]
          %v382 = vld [vmem:[%s2 + $0x10] sm:$0xf]
          %v383 = vld [vmem:[%s2 + $0x14] sm:$0xf]
          %v384 = vld [vmem:[%s2 + $0x18] sm:$0xf]
          %v385 = vld [vmem:[%s2 + $0x1c] sm:$0xf]
          %v394 = vunpack.c.l.b16 %v378
          %v395 = vunpack.c.l.b16 %v379
          %v396 = vunpack.c.l.b16 %v380
          %v397 = vunpack.c.l.b16 %v381
          %v398 = vunpack.c.l.b16 %v382
          %v399 = vunpack.c.l.b16 %v383
          %v400 = vunpack.c.l.b16 %v384
          %v401 = vunpack.c.l.b16 %v385
          %v402 = vpack.c.b16 %v395, %v394
          %v403 = vpack.c.b16 %v397, %v396
          %v404 = vpack.c.b16 %v399, %v398
          %v405 = vpack.c.b16 %v401, %v400
          %vm410 = vcmask 523264
          %v412 = vsel %vm410, %v377, 0
          %414 = vmatpush.bf16.msra.mxu0 0
          %415 = vmatpush.bf16.msra.mxu0 0
          %416 = vmatpush.bf16.msra.mxu0 0
          %417 = vmatpush.bf16.msra.mxu0 0
          %418 = vmatpush.bf16.msra.mxu0 %v405
          %419 = vmatpush.bf16.msra.mxu0 %v404
          %420 = vmatpush.bf16.msra.mxu0 %v403
          %421 = vmatpush.bf16.msra.mxu0 %v402
          %422 = vmatmul.bf16.gmra.mxu0 %v412
          %v423 = vpop.f32.mrf.mxu0
          %v424 = vadd.f32 0.0, %v423
          %v425 = vpop.f32.mrf.mxu0
          %426 = vdwg.mxu0
          %p427 = scmp.eq.s32.totalorder %s21, 1
          // Predicated region
          $region53: #{tpu_custom_call.1} parent=51 // pred_check
            %p428 = pneg %p427
          $region54: #{tpu_custom_call.1} parent=51 // pred_check_branch
            %430 = sbr.rel (%p428) target = $region56
          $region55: #{tpu_custom_call.1} parent=51 // pred_region
            %p431 = scmp.eq.s32.totalorder %s22, 0
            // Predicated region
            $region57: #{tpu_custom_call.1} parent=55 // pred_check
              %p432 = pneg %p431
            $region58: #{tpu_custom_call.1} parent=55 // pred_check_branch
              %434 = sbr.rel (%p432) target = $region60
            $region59: #{tpu_custom_call.1} parent=55 // pred_region
              %vm435 = vcmask 253952
              %436 = vst.msk [vmem:[#allocation3] sm:$0x1] %vm435, %v424
              %vm437 = vcmask 254976
              %438 = vst.msk [vmem:[#allocation3 + $0x1] sm:$0x3] %vm437, 0.0
            $region60: #{tpu_custom_call.1} parent=55 // pred_fallthru
              _
            %v439 = vld [vmem:[#allocation3] sm:$0x1]
            %v440 = vperm.slane %v439, 0
            %v441 = vsub.f32 %v424, %v440
            %v442 = vld [vmem:[#allocation3 + $0x1] sm:$0x1]
            %vm443 = vcmask 261120
            %v444 = vsel %vm443, %v441, 0.0
            %v445 = vrot.slane %v444, 4
            %v446 = vadd.f32 %v444, %v445
            %v447 = vrot.slane %v446, 2
            %v448 = vadd.f32 %v446, %v447
            %v449 = vrot.slane %v448, 1
            %v450 = vadd.f32 %v448, %v449
            %v451 = vadd.f32 %v442, %v450
            %vm452 = vcmask 253952
            %453 = vst.msk [vmem:[#allocation3 + $0x1] sm:$0x1] %vm452, %v451
            %v454 = vld [vmem:[#allocation3 + $0x2] sm:$0x1]
            %v455 = vmul.f32 %v441, %v441
            %v456 = vsel %vm443, %v455, 0.0
            %v457 = vrot.slane %v456, 4
            %v458 = vadd.f32 %v456, %v457
            %v459 = vrot.slane %v458, 2
            %v460 = vadd.f32 %v458, %v459
            %v461 = vrot.slane %v460, 1
            %v462 = vadd.f32 %v460, %v461
            %v463 = vadd.f32 %v454, %v462
            %464 = vst.msk [vmem:[#allocation3 + $0x2] sm:$0x1] %vm452, %v463
          $region56: #{tpu_custom_call.1} parent=51 // pred_fallthru
            _
          %p465 = scmp.eq.s32.totalorder %s21, 2
          // Predicated region
          $region61: #{tpu_custom_call.1} parent=51 // pred_check
            %p466 = pneg %p465
          $region62: #{tpu_custom_call.1} parent=51 // pred_check_branch
            %468 = sbr.rel (%p466) target = $region64
          $region63: #{tpu_custom_call.1} parent=51 // pred_region
            %v469 = vld [vmem:[%s4 + $0x2] sm:$0x1]
            %v470 = vld [vmem:[%s4 + $0x3] sm:$0x1]
            %v471 = vld [vmem:[#allocation3 + $0x1] sm:$0x1]
            %v472 = vmul.f32 %v471, 0.125
            %v473 = vld [vmem:[#allocation3] sm:$0x1]
            %v474 = vadd.f32 %v473, %v472
            %v475 = vld [vmem:[#allocation3 + $0x2] sm:$0x1]
            %v476 = vmul.f32 %v475, 0.125
            %v477 = vmul.f32 %v472, %v472
            %v478 = vsub.f32 %v476, %v477
            %v479 = vmax.f32 %v478, 0.0
            %v480 = vperm.slane %v474, 0
            %v481 = vsub.f32 %v424, %v480
            %v482 = vadd.f32 %v479, 1e-05
            %v483 = vrsqrt.pop %v482
            %v484 = vmul.f32 %v483, %v482
            %v485 = vmul.f32 %v484, %v483
            %v486 = vmul.f32 0.5, %v485
            %v487 = vsub.f32 1.5, %v486
            %v488 = vmul.f32 %v483, %v487
            %vm489 = vweird.f32 %v482
            %vm490 = vweird.f32 %v483
            %vm491 = vmor %vm489, %vm490
            %v492 = vsel %vm491, %v483, %v488
            %v493 = vperm.slane %v492, 0
            %v494 = vmul.f32 %v481, %v493
            %v495 = vperm.slane %v469, 0
            %v496 = vmul.f32 %v494, %v495
            %v497 = vperm.slane %v470, 0
            %v498 = vadd.f32 %v496, %v497
            %v499 = vmax.f32 %v498, 0.0
            %v500 = vld [vmem:[%s3] sm:$0xf]
            %v501 = vpack.c.bf16 %v499, %v499
            %vm502 = vcmask 261120
            %v504 = vsel %vm502, %v500, 0
            %v507 = vsel %vm502, %v501, 0
            %509 = vmatpush.bf16.xpose.msra.mxu0 0
            %510 = vmatpush.bf16.xpose.msra.mxu0 0
            %511 = vmatpush.bf16.xpose.msra.mxu0 0
            %512 = vmatpush.bf16.xpose.msra.mxu0 0
            %513 = vmatpush.bf16.xpose.msra.mxu0 0
            %514 = vmatpush.bf16.xpose.msra.mxu0 0
            %515 = vmatpush.bf16.xpose.msra.mxu0 0
            %516 = vmatpush.bf16.xpose.msra.mxu0 %v507
            %517 = vmatmul.bf16.gmra.mxu0 %v504
            %v518 = vpop.f32.mrf.mxu0
            %v519 = vadd.f32 0.0, %v518
            %v520 = vpop.f32.mrf.mxu0
            %521 = vdwg.mxu0
            %v522 = vld [vmem:[%s4 + $0x4] sm:$0x1]
            %524 = vset.pattern.permute.xlu0 0
            %525 = vperm.xlu0 %524, %v522
            %v526 = vpop.permute.xlu0 %525
            %v528 = vadd.f32 %v519, %v526
            %vm529 = vcmask 57344
            %530 = vst.msk [vmem:[#allocation4] sm:$0x1] %vm529, %v528
          $region64: #{tpu_custom_call.1} parent=51 // pred_fallthru
            _
        $region52: #{tpu_custom_call.1} parent=39 // pred_fallthru
          _
        // Predicated region
        $region65: #{tpu_custom_call.1} parent=39 // pred_check
          %p531 = pneg %p157
        $region66: #{tpu_custom_call.1} parent=39 // pred_check_branch
          %533 = sbr.rel (%p531) target = $region68
        $region67: #{tpu_custom_call.1} parent=39 // pred_region
          %535 = vsyncadd [#allocation5], 0
          %s536 = scalar_lea.hbm %s5, %s22
          %s538 = sshll.u32 [#allocation4], 4
          %s539 = int_to_ptr.vmem [resolvable:$true] %s538
          %s540 = sshll.u32 %s536, 4
          %s541 = int_to_ptr.hbm [resolvable:$true] %s540
          %543 = dma.vmem_to_hbm [thread:$0]  %s539, 16, %s541, [#allocation5]
        $region68: #{tpu_custom_call.1} parent=39 // pred_fallthru
          _
        // Predicated region
        $region69: #{tpu_custom_call.1} parent=39 // pred_check
          %p544 = pneg %p157
        $region70: #{tpu_custom_call.1} parent=39 // pred_check_branch
          %546 = sbr.rel (%p544) target = $region72
        $region71: #{tpu_custom_call.1} parent=39 // pred_region
          %548 = dma.done [#allocation5], 16
        $region72: #{tpu_custom_call.1} parent=39 // pred_fallthru
          _
      $region40: #{tpu_custom_call.1} parent=5 // pred_fallthru
        _
      %p549 = scmp.le.s32.totalorder 2, %s12
      // Predicated region
      $region73: #{tpu_custom_call.1} parent=5 // pred_check
        %p550 = pneg %p549
      $region74: #{tpu_custom_call.1} parent=5 // pred_check_branch
        %552 = sbr.rel (%p550) target = $region76
      $region75: #{tpu_custom_call.1} parent=5 // pred_region
        %s553 = ssub.s32 %s12, 2
      $region76: #{tpu_custom_call.1} parent=5 // pred_fallthru
        _
    $region6: #{tpu_custom_call.1} parent=1 // loop_footer
      %s16 = sadd.s32 1, %s12
    $region7: #{tpu_custom_call.1} parent=1 // loop_footer_branch
      %11 = sbr.rel target = $region3
    $region8: #{tpu_custom_call.1} parent=1 // loop_exit
      _
    %554 = vsyncpa [#allocation5], 1
    %s555 = scalar_lea.sflag [#allocation5], 1
    %556 = vsyncpa %s555, 1

</llo_original>
